<compile_context>
chip_gen: v5e
topology: v5e:2x2
jax: 0.10.0
libtpu: 0.0.40
codegen_flags: <defaults>
</compile_context>

<pallas_src>
import functools

import jax
import jax.numpy as jnp
from jax.experimental import pallas as pl
from jax.experimental.pallas import tpu as pltpu


def _highpass_kernel(x_ref, o_ref, *, inv_w_hpf):
    """3x3 high-pass stencil on one channel-last block.

    x_ref, o_ref: (H, W, TL)  — TL flattened N*C channels on the lane axis.
    """
    x = x_ref[...]                       # native dtype, single block load
    H, W, L = x.shape

    # Horizontal (W / sublane axis) neighbors with zero border, in input dtype.
    zcol = jnp.zeros((H, 1, L), x.dtype)
    left = jnp.concatenate([zcol, x[:, : W - 1, :]], axis=1)   # x[i, j-1]
    right = jnp.concatenate([x[:, 1:, :], zcol], axis=1)       # x[i, j+1]
    row_sum = left + x + right

    # Vertical (H / leading axis) neighbors with zero border.
    zrow = jnp.zeros((1, W, L), x.dtype)
    up = jnp.concatenate([zrow, row_sum[: H - 1]], axis=0)     # row_sum[i-1]
    down = jnp.concatenate([row_sum[1:], zrow], axis=0)        # row_sum[i+1]
    box = up + row_sum + down                                  # 3x3 box sum

    # filter = [[-1,-1,-1],[-1,8,-1],[-1,-1,-1]] / w_hpf
    #   => y = (8*x - (box - x)) / w_hpf = (9*x - box) / w_hpf
    y = (x.astype(jnp.float32) * 9.0 - box.astype(jnp.float32)) * inv_w_hpf
    o_ref[...] = y.astype(o_ref.dtype)


def _round_up(v, m):
    return (v + m - 1) // m * m


def _pick_lane_tile(nc, h, w, itemsize, budget_bytes=8 << 20):
    """Lane-axis tile (multiple of 128, or full nc), layout-padding aware.

    Budget keeps 2x(in)+2x(out) double-buffered blocks comfortably under the
    48 MiB vmem_limit we request (v7x-safe: 64 MiB physical VMEM per TC).
    """
    if nc <= 128:
        return nc                         # full lane extent (== array dim)
    sub = 8 * max(1, 4 // itemsize)       # sublane rounding (f32: 8, bf16: 16)
    bytes_per_group = h * _round_up(w, sub) * 128 * itemsize
    groups = max(1, budget_bytes // max(bytes_per_group, 1))
    tl = groups * 128
    # Keep at least 2 grid steps so the "parallel" axis can use both TCs (v7x).
    half = _round_up(pl.cdiv(nc, 2), 128)
    if half < nc:
        tl = min(tl, half)
    if tl >= nc:
        return nc
    return tl


def highpass_forward(x, w_hpf):
    """HighPass.forward: depthwise 3x3 high-pass conv, padding=1.

    x: (N, C, H, W);  w_hpf: python float (fixed module buffer scale).
    """
    N, C, H, W = x.shape
    NC = N * C
    itemsize = jnp.dtype(x.dtype).itemsize

    # Channel-last view: (H, W, N*C) — flattened channels on the lane axis.
    # (Layout plumbing only; the stencil itself never mixes lanes.)
    xt = jnp.transpose(x.reshape(NC, H, W), (1, 2, 0))

    tl = _pick_lane_tile(NC, H, W, itemsize)
    grid = (pl.cdiv(NC, tl),)
    kernel = functools.partial(_highpass_kernel, inv_w_hpf=1.0 / float(w_hpf))

    out_t = pl.pallas_call(
        kernel,
        out_shape=jax.ShapeDtypeStruct((H, W, NC), x.dtype),
        grid=grid,
        in_specs=[pl.BlockSpec((H, W, tl), lambda i: (0, 0, i))],
        out_specs=pl.BlockSpec((H, W, tl), lambda i: (0, 0, i)),
        compiler_params=pltpu.CompilerParams(
            dimension_semantics=("parallel",),
            vmem_limit_bytes=48 << 20),
        cost_estimate=pl.CostEstimate(
            flops=7 * NC * H * W,
            transcendentals=0,
            bytes_accessed=2 * NC * H * W * itemsize),
    )(xt)

    return jnp.transpose(out_t, (2, 0, 1)).reshape(N, C, H, W)


def highpass_reference(x, w_hpf):
    """Pure-JAX reference matching F.conv2d(x, filter, padding=1, groups=C)."""
    C = x.shape[1]
    k = jnp.array([[-1., -1., -1.], [-1., 8., -1.], [-1., -1., -1.]],
                  jnp.float32) / w_hpf
    filt = jnp.broadcast_to(k, (C, 1, 3, 3)).astype(x.dtype)   # OIHW, depthwise
    return jax.lax.conv_general_dilated(
        x, filt, window_strides=(1, 1), padding=((1, 1), (1, 1)),
        dimension_numbers=("NCHW", "OIHW", "NCHW"),
        feature_group_count=C)


if __name__ == "__main__":
    # Small shapes consistent with the module: batch=2, channels=4, 16x16.
    N, C, H, W = 2, 4, 16, 16
    w_hpf = 1.0

    key = jax.random.PRNGKey(0)
    x = jax.random.normal(key, (N, C, H, W), jnp.float32)

    out = jax.block_until_ready(highpass_forward(x, w_hpf))
    ref = highpass_reference(x, w_hpf)

    assert out.shape == (N, C, H, W)
    err = float(jnp.max(jnp.abs(out - ref)))
    assert jnp.allclose(out, ref, atol=1e-4, rtol=1e-4), err

    print("KERNEL_OK")
</pallas_src>

<mosaic_0001>
module attributes {stable_mosaic.version = 11 : i64} {
  func.func @_highpass_kernel(%arg0: i32, %arg1: memref<16x16x8xf32, #tpu.memory_space<vmem>>, %arg2: memref<16x16x8xf32, #tpu.memory_space<vmem>>) attributes {dimension_semantics = [#tpu.dimension_semantics<parallel>], iteration_bounds = array<i64: 1>, scalar_prefetch = 0 : i64, scratch_operands = 0 : i64, tpu.core_type = #tpu.core_type<tc>, window_params = [{transform_indices = @transform_0, window_bounds = array<i64: 16, 16, 8>}, {transform_indices = @transform_1, window_bounds = array<i64: 16, 16, 8>}]} {
    %c0 = arith.constant 0 : index
    %c0_0 = arith.constant 0 : index
    %c0_1 = arith.constant 0 : index
    %0 = vector.load %arg1[%c0, %c0_0, %c0_1] : memref<16x16x8xf32, #tpu.memory_space<vmem>>, vector<16x16x8xf32>
    %cst = arith.constant 0.000000e+00 : f32
    %1 = vector.broadcast %cst : f32 to vector<16x1x8xf32>
    %2 = vector.extract_strided_slice %0 {offsets = [0, 0, 0], sizes = [16, 15, 8], strides = [1, 1, 1]} : vector<16x16x8xf32> to vector<16x15x8xf32>
    %3 = tpu.concatenate %1, %2 in 1 : vector<16x1x8xf32>, vector<16x15x8xf32> -> vector<16x16x8xf32>
    %4 = vector.extract_strided_slice %0 {offsets = [0, 1, 0], sizes = [16, 15, 8], strides = [1, 1, 1]} : vector<16x16x8xf32> to vector<16x15x8xf32>
    %5 = tpu.concatenate %4, %1 in 1 : vector<16x15x8xf32>, vector<16x1x8xf32> -> vector<16x16x8xf32>
    %6 = arith.addf %3, %0 : vector<16x16x8xf32>
    %7 = arith.addf %6, %5 : vector<16x16x8xf32>
    %cst_2 = arith.constant 0.000000e+00 : f32
    %8 = vector.broadcast %cst_2 : f32 to vector<1x16x8xf32>
    %9 = vector.extract_strided_slice %7 {offsets = [0, 0, 0], sizes = [15, 16, 8], strides = [1, 1, 1]} : vector<16x16x8xf32> to vector<15x16x8xf32>
    %10 = tpu.concatenate %8, %9 in 0 : vector<1x16x8xf32>, vector<15x16x8xf32> -> vector<16x16x8xf32>
    %11 = vector.extract_strided_slice %7 {offsets = [1, 0, 0], sizes = [15, 16, 8], strides = [1, 1, 1]} : vector<16x16x8xf32> to vector<15x16x8xf32>
    %12 = tpu.concatenate %11, %8 in 0 : vector<15x16x8xf32>, vector<1x16x8xf32> -> vector<16x16x8xf32>
    %13 = arith.addf %10, %7 : vector<16x16x8xf32>
    %14 = arith.addf %13, %12 : vector<16x16x8xf32>
    %cst_3 = arith.constant 9.000000e+00 : f32
    %15 = vector.broadcast %cst_3 : f32 to vector<16x16x8xf32>
    %16 = arith.mulf %0, %15 : vector<16x16x8xf32>
    %17 = arith.subf %16, %14 : vector<16x16x8xf32>
    %cst_4 = arith.constant 1.000000e+00 : f32
    %18 = vector.broadcast %cst_4 : f32 to vector<16x16x8xf32>
    %19 = arith.mulf %17, %18 : vector<16x16x8xf32>
    %c0_5 = arith.constant 0 : index
    %c0_6 = arith.constant 0 : index
    %c0_7 = arith.constant 0 : index
    %20 = vector.load %arg2[%c0_5, %c0_6, %c0_7] : memref<16x16x8xf32, #tpu.memory_space<vmem>>, vector<16x16x8xf32>
    tpu.vector_store %arg2[%c0_5, %c0_6, %c0_7], %19 {strides = array<i32>} : memref<16x16x8xf32, #tpu.memory_space<vmem>>, vector<16x16x8xf32>,
    return
  }
  func.func @transform_0(%arg0: i32) -> (i32, i32, i32) {
    %c0_i32 = arith.constant 0 : i32
    %c0_i32_0 = arith.constant 0 : i32
    %c0_i32_1 = arith.constant 0 : i32
    return %c0_i32, %c0_i32_0, %arg0 : i32, i32, i32
  }
  func.func @transform_1(%arg0: i32) -> (i32, i32, i32) {
    %c0_i32 = arith.constant 0 : i32
    %c0_i32_0 = arith.constant 0 : i32
    %c0_i32_1 = arith.constant 0 : i32
    return %c0_i32, %c0_i32_0, %arg0 : i32, i32, i32
  }
}

</mosaic_0001>

<llo_original>
// kernel: tpu_custom_call.1
$region0: #{tpu_custom_call.1}
  #allocation0 [shape = 'u32[]', space=smem, size = 0x4, offset = 0x4, fixed_abs, tag = 'smem constant byte address 0x4 - core index']
  #allocation1 [shape = 'u32[72,128]{1,0:T(1,128)}', space=vmem, size = 0x9000, scoped, tag = 'internal scratch']
  %s0 = inlined_call_operand.vmem [shape: f32[16,16,8], index: 0, kind: input, shape index: {}]
  %s1 = inlined_call_operand.vmem [shape: f32[16,16,8], index: 1, kind: output, shape index: {}]
  %s2 = sld [smem:[#allocation0]]
  $region14: #{tpu_custom_call.1} parent=0
    _
  %s4 = ssub.s32 1, %s2
  %s5 = scalar_select 0, %s4, %s2
  // Predicated region
  $region2: #{tpu_custom_call.1} parent=0 // pred_check
    _
  $region3: #{tpu_custom_call.1} parent=0 // pred_check_branch
    %7 = sbr.rel (0) target = $region5
  $region4: #{tpu_custom_call.1} parent=0 // pred_region
    _
  $region5: #{tpu_custom_call.1} parent=0 // pred_fallthru
    _
  %v8 = vld [vmem:[%s0] sm:$0xff]
  %v9 = vld [vmem:[%s0 + $0x8] sm:$0xff]
  %v10 = vld [vmem:[%s0 + $0x10] sm:$0xff]
  %v11 = vld [vmem:[%s0 + $0x18] sm:$0xff]
  %v12 = vld [vmem:[%s0 + $0x20] sm:$0xff]
  %v13 = vld [vmem:[%s0 + $0x28] sm:$0xff]
  %v14 = vld [vmem:[%s0 + $0x30] sm:$0xff]
  %v15 = vld [vmem:[%s0 + $0x38] sm:$0xff]
  %v16 = vld [vmem:[%s0 + $0x40] sm:$0xff]
  %v17 = vld [vmem:[%s0 + $0x48] sm:$0xff]
  %v18 = vld [vmem:[%s0 + $0x50] sm:$0xff]
  %v19 = vld [vmem:[%s0 + $0x58] sm:$0xff]
  %v20 = vld [vmem:[%s0 + $0x60] sm:$0xff]
  %v21 = vld [vmem:[%s0 + $0x68] sm:$0xff]
  %v22 = vld [vmem:[%s0 + $0x70] sm:$0xff]
  %v23 = vld [vmem:[%s0 + $0x78] sm:$0xff]
  %v24 = vld [vmem:[%s0 + $0x80] sm:$0xff]
  %v25 = vld [vmem:[%s0 + $0x88] sm:$0xff]
  %v26 = vld [vmem:[%s0 + $0x90] sm:$0xff]
  %v27 = vld [vmem:[%s0 + $0x98] sm:$0xff]
  %v28 = vld [vmem:[%s0 + $0xa0] sm:$0xff]
  %v29 = vld [vmem:[%s0 + $0xa8] sm:$0xff]
  %v30 = vld [vmem:[%s0 + $0xb0] sm:$0xff]
  %v31 = vld [vmem:[%s0 + $0xb8] sm:$0xff]
  %v32 = vld [vmem:[%s0 + $0xc0] sm:$0xff]
  %v33 = vld [vmem:[%s0 + $0xc8] sm:$0xff]
  %v34 = vld [vmem:[%s0 + $0xd0] sm:$0xff]
  %v35 = vld [vmem:[%s0 + $0xd8] sm:$0xff]
  %v36 = vld [vmem:[%s0 + $0xe0] sm:$0xff]
  %v37 = vld [vmem:[%s0 + $0xe8] sm:$0xff]
  %v38 = vld [vmem:[%s0 + $0xf0] sm:$0xff]
  %v39 = vld [vmem:[%s0 + $0xf8] sm:$0xff]
  %vm72 = vcmask 1040384
  %v73 = vrot.slane %v8, 7
  %v74 = vrot.slane %v9, 7
  %v75 = vsel %vm72, %v73, %v74
  %v76 = vrot.slane %v10, 7
  %v77 = vrot.slane %v11, 7
  %v78 = vsel %vm72, %v76, %v77
  %v79 = vrot.slane %v12, 7
  %v80 = vrot.slane %v13, 7
  %v81 = vsel %vm72, %v79, %v80
  %v82 = vrot.slane %v14, 7
  %v83 = vrot.slane %v15, 7
  %v84 = vsel %vm72, %v82, %v83
  %v85 = vrot.slane %v16, 7
  %v86 = vrot.slane %v17, 7
  %v87 = vsel %vm72, %v85, %v86
  %v88 = vrot.slane %v18, 7
  %v89 = vrot.slane %v19, 7
  %v90 = vsel %vm72, %v88, %v89
  %v91 = vrot.slane %v20, 7
  %v92 = vrot.slane %v21, 7
  %v93 = vsel %vm72, %v91, %v92
  %v94 = vrot.slane %v22, 7
  %v95 = vrot.slane %v23, 7
  %v96 = vsel %vm72, %v94, %v95
  %v97 = vrot.slane %v24, 7
  %v98 = vrot.slane %v25, 7
  %v99 = vsel %vm72, %v97, %v98
  %v100 = vrot.slane %v26, 7
  %v101 = vrot.slane %v27, 7
  %v102 = vsel %vm72, %v100, %v101
  %v103 = vrot.slane %v28, 7
  %v104 = vrot.slane %v29, 7
  %v105 = vsel %vm72, %v103, %v104
  %v106 = vrot.slane %v30, 7
  %v107 = vrot.slane %v31, 7
  %v108 = vsel %vm72, %v106, %v107
  %v109 = vrot.slane %v32, 7
  %v110 = vrot.slane %v33, 7
  %v111 = vsel %vm72, %v109, %v110
  %v112 = vrot.slane %v34, 7
  %v113 = vrot.slane %v35, 7
  %v114 = vsel %vm72, %v112, %v113
  %v115 = vrot.slane %v36, 7
  %v116 = vrot.slane %v37, 7
  %v117 = vsel %vm72, %v115, %v116
  %v118 = vrot.slane %v38, 7
  %v119 = vrot.slane %v39, 7
  %v120 = vsel %vm72, %v118, %v119
  %v153 = vsel %vm72, 0.0, %v73
  %v154 = vsel %vm72, 0.0, %v76
  %v155 = vsel %vm72, 0.0, %v79
  %v156 = vsel %vm72, 0.0, %v82
  %v157 = vsel %vm72, 0.0, %v85
  %v158 = vsel %vm72, 0.0, %v88
  %v159 = vsel %vm72, 0.0, %v91
  %v160 = vsel %vm72, 0.0, %v94
  %v161 = vsel %vm72, 0.0, %v97
  %v162 = vsel %vm72, 0.0, %v100
  %v163 = vsel %vm72, 0.0, %v103
  %v164 = vsel %vm72, 0.0, %v106
  %v165 = vsel %vm72, 0.0, %v109
  %v166 = vsel %vm72, 0.0, %v112
  %v167 = vsel %vm72, 0.0, %v115
  %v168 = vsel %vm72, 0.0, %v118
  %vm169 = vcmask 1046528
  %v170 = vrot.slane %v8, 1
  %v171 = vrot.slane %v9, 1
  %v172 = vsel %vm169, %v170, %v171
  %v173 = vrot.slane %v10, 1
  %v174 = vrot.slane %v11, 1
  %v175 = vsel %vm169, %v173, %v174
  %v176 = vrot.slane %v12, 1
  %v177 = vrot.slane %v13, 1
  %v178 = vsel %vm169, %v176, %v177
  %v179 = vrot.slane %v14, 1
  %v180 = vrot.slane %v15, 1
  %v181 = vsel %vm169, %v179, %v180
  %v182 = vrot.slane %v16, 1
  %v183 = vrot.slane %v17, 1
  %v184 = vsel %vm169, %v182, %v183
  %v185 = vrot.slane %v18, 1
  %v186 = vrot.slane %v19, 1
  %v187 = vsel %vm169, %v185, %v186
  %v188 = vrot.slane %v20, 1
  %v189 = vrot.slane %v21, 1
  %v190 = vsel %vm169, %v188, %v189
  %v191 = vrot.slane %v22, 1
  %v192 = vrot.slane %v23, 1
  %v193 = vsel %vm169, %v191, %v192
  %v194 = vrot.slane %v24, 1
  %v195 = vrot.slane %v25, 1
  %v196 = vsel %vm169, %v194, %v195
  %v197 = vrot.slane %v26, 1
  %v198 = vrot.slane %v27, 1
  %v199 = vsel %vm169, %v197, %v198
  %v200 = vrot.slane %v28, 1
  %v201 = vrot.slane %v29, 1
  %v202 = vsel %vm169, %v200, %v201
  %v203 = vrot.slane %v30, 1
  %v204 = vrot.slane %v31, 1
  %v205 = vsel %vm169, %v203, %v204
  %v206 = vrot.slane %v32, 1
  %v207 = vrot.slane %v33, 1
  %v208 = vsel %vm169, %v206, %v207
  %v209 = vrot.slane %v34, 1
  %v210 = vrot.slane %v35, 1
  %v211 = vsel %vm169, %v209, %v210
  %v212 = vrot.slane %v36, 1
  %v213 = vrot.slane %v37, 1
  %v214 = vsel %vm169, %v212, %v213
  %v215 = vrot.slane %v38, 1
  %v216 = vrot.slane %v39, 1
  %v217 = vsel %vm169, %v215, %v216
  %v250 = vsel %vm169, %v171, 0.0
  %v251 = vsel %vm169, %v174, 0.0
  %v252 = vsel %vm169, %v177, 0.0
  %v253 = vsel %vm169, %v180, 0.0
  %v254 = vsel %vm169, %v183, 0.0
  %v255 = vsel %vm169, %v186, 0.0
  %v256 = vsel %vm169, %v189, 0.0
  %v257 = vsel %vm169, %v192, 0.0
  %v258 = vsel %vm169, %v195, 0.0
  %v259 = vsel %vm169, %v198, 0.0
  %v260 = vsel %vm169, %v201, 0.0
  %v261 = vsel %vm169, %v204, 0.0
  %v262 = vsel %vm169, %v207, 0.0
  %v263 = vsel %vm169, %v210, 0.0
  %v264 = vsel %vm169, %v213, 0.0
  %v265 = vsel %vm169, %v216, 0.0
  %v266 = vadd.f32 %v153, %v8
  %v267 = vadd.f32 %v75, %v9
  %v268 = vadd.f32 %v154, %v10
  %v269 = vadd.f32 %v78, %v11
  %v270 = vadd.f32 %v155, %v12
  %v271 = vadd.f32 %v81, %v13
  %v272 = vadd.f32 %v156, %v14
  %v273 = vadd.f32 %v84, %v15
  %v274 = vadd.f32 %v157, %v16
  %v275 = vadd.f32 %v87, %v17
  %v276 = vadd.f32 %v158, %v18
  %v277 = vadd.f32 %v90, %v19
  %v278 = vadd.f32 %v159, %v20
  %v279 = vadd.f32 %v93, %v21
  %v280 = vadd.f32 %v160, %v22
  %v281 = vadd.f32 %v96, %v23
  %v282 = vadd.f32 %v161, %v24
  %v283 = vadd.f32 %v99, %v25
  %v284 = vadd.f32 %v162, %v26
  %v285 = vadd.f32 %v102, %v27
  %v286 = vadd.f32 %v163, %v28
  %v287 = vadd.f32 %v105, %v29
  %v288 = vadd.f32 %v164, %v30
  %v289 = vadd.f32 %v108, %v31
  %v290 = vadd.f32 %v165, %v32
  %v291 = vadd.f32 %v111, %v33
  %v292 = vadd.f32 %v166, %v34
  %v293 = vadd.f32 %v114, %v35
  %v294 = vadd.f32 %v167, %v36
  %v295 = vadd.f32 %v117, %v37
  %v296 = vadd.f32 %v168, %v38
  %v297 = vadd.f32 %v120, %v39
  %v298 = vadd.f32 %v266, %v172
  %v299 = vadd.f32 %v267, %v250
  %v300 = vadd.f32 %v268, %v175
  %v301 = vadd.f32 %v269, %v251
  %v302 = vadd.f32 %v270, %v178
  %v303 = vadd.f32 %v271, %v252
  %v304 = vadd.f32 %v272, %v181
  %v305 = vadd.f32 %v273, %v253
  %v306 = vadd.f32 %v274, %v184
  %v307 = vadd.f32 %v275, %v254
  %v308 = vadd.f32 %v276, %v187
  %v309 = vadd.f32 %v277, %v255
  %v310 = vadd.f32 %v278, %v190
  %v311 = vadd.f32 %v279, %v256
  %v312 = vadd.f32 %v280, %v193
  %v313 = vadd.f32 %v281, %v257
  %v314 = vadd.f32 %v282, %v196
  %v315 = vadd.f32 %v283, %v258
  %v316 = vadd.f32 %v284, %v199
  %v317 = vadd.f32 %v285, %v259
  %v318 = vadd.f32 %v286, %v202
  %v319 = vadd.f32 %v287, %v260
  %v320 = vadd.f32 %v288, %v205
  %v321 = vadd.f32 %v289, %v261
  %v322 = vadd.f32 %v290, %v208
  %v323 = vadd.f32 %v291, %v262
  %v324 = vadd.f32 %v292, %v211
  %v325 = vadd.f32 %v293, %v263
  %v326 = vadd.f32 %v294, %v214
  %v327 = vadd.f32 %v295, %v264
  %v328 = vadd.f32 %v296, %v217
  %v329 = vadd.f32 %v297, %v265
  %v330 = vadd.f32 %v298, 0.0
  %v331 = vadd.f32 %v299, 0.0
  %v332 = vadd.f32 %v298, %v300
  %v333 = vadd.f32 %v299, %v301
  %v334 = vadd.f32 %v300, %v302
  %v335 = vadd.f32 %v301, %v303
  %v336 = vadd.f32 %v302, %v304
  %v337 = vadd.f32 %v303, %v305
  %v338 = vadd.f32 %v304, %v306
  %v339 = vadd.f32 %v305, %v307
  %v340 = vadd.f32 %v306, %v308
  %v341 = vadd.f32 %v307, %v309
  %v342 = vadd.f32 %v308, %v310
  %v343 = vadd.f32 %v309, %v311
  %v344 = vadd.f32 %v310, %v312
  %v345 = vadd.f32 %v311, %v313
  %v346 = vadd.f32 %v312, %v314
  %v347 = vadd.f32 %v313, %v315
  %v348 = vadd.f32 %v314, %v316
  %v349 = vadd.f32 %v315, %v317
  %v350 = vadd.f32 %v316, %v318
  %v351 = vadd.f32 %v317, %v319
  %v352 = vadd.f32 %v318, %v320
  %v353 = vadd.f32 %v319, %v321
  %v354 = vadd.f32 %v320, %v322
  %v355 = vadd.f32 %v321, %v323
  %v356 = vadd.f32 %v322, %v324
  %v357 = vadd.f32 %v323, %v325
  %v358 = vadd.f32 %v324, %v326
  %v359 = vadd.f32 %v325, %v327
  %v360 = vadd.f32 %v326, %v328
  %v361 = vadd.f32 %v327, %v329
  %v362 = vadd.f32 %v330, %v300
  %v363 = vadd.f32 %v331, %v301
  %v364 = vadd.f32 %v332, %v302
  %v365 = vadd.f32 %v333, %v303
  %v366 = vadd.f32 %v334, %v304
  %v367 = vadd.f32 %v335, %v305
  %v368 = vadd.f32 %v336, %v306
  %v369 = vadd.f32 %v337, %v307
  %v370 = vadd.f32 %v338, %v308
  %v371 = vadd.f32 %v339, %v309
  %v372 = vadd.f32 %v340, %v310
  %v373 = vadd.f32 %v341, %v311
  %v374 = vadd.f32 %v342, %v312
  %v375 = vadd.f32 %v343, %v313
  %v376 = vadd.f32 %v344, %v314
  %v377 = vadd.f32 %v345, %v315
  %v378 = vadd.f32 %v346, %v316
  %v379 = vadd.f32 %v347, %v317
  %v380 = vadd.f32 %v348, %v318
  %v381 = vadd.f32 %v349, %v319
  %v382 = vadd.f32 %v350, %v320
  %v383 = vadd.f32 %v351, %v321
  %v384 = vadd.f32 %v352, %v322
  %v385 = vadd.f32 %v353, %v323
  %v386 = vadd.f32 %v354, %v324
  %v387 = vadd.f32 %v355, %v325
  %v388 = vadd.f32 %v356, %v326
  %v389 = vadd.f32 %v357, %v327
  %v390 = vadd.f32 %v358, %v328
  %v391 = vadd.f32 %v359, %v329
  %v392 = vadd.f32 %v360, 0.0
  %v393 = vadd.f32 %v361, 0.0
  %v394 = vmul.f32 %v8, 9.0
  %v395 = vmul.f32 %v9, 9.0
  %v396 = vmul.f32 %v10, 9.0
  %v397 = vmul.f32 %v11, 9.0
  %v398 = vmul.f32 %v12, 9.0
  %v399 = vmul.f32 %v13, 9.0
  %v400 = vmul.f32 %v14, 9.0
  %v401 = vmul.f32 %v15, 9.0
  %v402 = vmul.f32 %v16, 9.0
  %v403 = vmul.f32 %v17, 9.0
  %v404 = vmul.f32 %v18, 9.0
  %v405 = vmul.f32 %v19, 9.0
  %v406 = vmul.f32 %v20, 9.0
  %v407 = vmul.f32 %v21, 9.0
  %v408 = vmul.f32 %v22, 9.0
  %v409 = vmul.f32 %v23, 9.0
  %v410 = vmul.f32 %v24, 9.0
  %v411 = vmul.f32 %v25, 9.0
  %v412 = vmul.f32 %v26, 9.0
  %v413 = vmul.f32 %v27, 9.0
  %v414 = vmul.f32 %v28, 9.0
  %v415 = vmul.f32 %v29, 9.0
  %v416 = vmul.f32 %v30, 9.0
  %v417 = vmul.f32 %v31, 9.0
  %v418 = vmul.f32 %v32, 9.0
  %v419 = vmul.f32 %v33, 9.0
  %v420 = vmul.f32 %v34, 9.0
  %v421 = vmul.f32 %v35, 9.0
  %v422 = vmul.f32 %v36, 9.0
  %v423 = vmul.f32 %v37, 9.0
  %v424 = vmul.f32 %v38, 9.0
  %v425 = vmul.f32 %v39, 9.0
  %v426 = vsub.f32 %v394, %v362
  %v427 = vsub.f32 %v395, %v363
  %v428 = vsub.f32 %v396, %v364
  %v429 = vsub.f32 %v397, %v365
  %v430 = vsub.f32 %v398, %v366
  %v431 = vsub.f32 %v399, %v367
  %v432 = vsub.f32 %v400, %v368
  %v433 = vsub.f32 %v401, %v369
  %v434 = vsub.f32 %v402, %v370
  %v435 = vsub.f32 %v403, %v371
  %v436 = vsub.f32 %v404, %v372
  %v437 = vsub.f32 %v405, %v373
  %v438 = vsub.f32 %v406, %v374
  %v439 = vsub.f32 %v407, %v375
  %v440 = vsub.f32 %v408, %v376
  %v441 = vsub.f32 %v409, %v377
  %v442 = vsub.f32 %v410, %v378
  %v443 = vsub.f32 %v411, %v379
  %v444 = vsub.f32 %v412, %v380
  %v445 = vsub.f32 %v413, %v381
  %v446 = vsub.f32 %v414, %v382
  %v447 = vsub.f32 %v415, %v383
  %v448 = vsub.f32 %v416, %v384
  %v449 = vsub.f32 %v417, %v385
  %v450 = vsub.f32 %v418, %v386
  %v451 = vsub.f32 %v419, %v387
  %v452 = vsub.f32 %v420, %v388
  %v453 = vsub.f32 %v421, %v389
  %v454 = vsub.f32 %v422, %v390
  %v455 = vsub.f32 %v423, %v391
  %v456 = vsub.f32 %v424, %v392
  %v457 = vsub.f32 %v425, %v393
  %vm458 = vcmask 64512
  %459 = vst.msk [vmem:[%s1] sm:$0xff] %vm458, %v426
  %460 = vst.msk [vmem:[%s1 + $0x8] sm:$0xff] %vm458, %v427
  %461 = vst.msk [vmem:[%s1 + $0x10] sm:$0xff] %vm458, %v428
  %462 = vst.msk [vmem:[%s1 + $0x18] sm:$0xff] %vm458, %v429
  %463 = vst.msk [vmem:[%s1 + $0x20] sm:$0xff] %vm458, %v430
  %464 = vst.msk [vmem:[%s1 + $0x28] sm:$0xff] %vm458, %v431
  %465 = vst.msk [vmem:[%s1 + $0x30] sm:$0xff] %vm458, %v432
  %466 = vst.msk [vmem:[%s1 + $0x38] sm:$0xff] %vm458, %v433
  %467 = vst.msk [vmem:[%s1 + $0x40] sm:$0xff] %vm458, %v434
  %468 = vst.msk [vmem:[%s1 + $0x48] sm:$0xff] %vm458, %v435
  %469 = vst.msk [vmem:[%s1 + $0x50] sm:$0xff] %vm458, %v436
  %470 = vst.msk [vmem:[%s1 + $0x58] sm:$0xff] %vm458, %v437
  %471 = vst.msk [vmem:[%s1 + $0x60] sm:$0xff] %vm458, %v438
  %472 = vst.msk [vmem:[%s1 + $0x68] sm:$0xff] %vm458, %v439
  %473 = vst.msk [vmem:[%s1 + $0x70] sm:$0xff] %vm458, %v440
  %474 = vst.msk [vmem:[%s1 + $0x78] sm:$0xff] %vm458, %v441
  %475 = vst.msk [vmem:[%s1 + $0x80] sm:$0xff] %vm458, %v442
  %476 = vst.msk [vmem:[%s1 + $0x88] sm:$0xff] %vm458, %v443
  %477 = vst.msk [vmem:[%s1 + $0x90] sm:$0xff] %vm458, %v444
  %478 = vst.msk [vmem:[%s1 + $0x98] sm:$0xff] %vm458, %v445
  %479 = vst.msk [vmem:[%s1 + $0xa0] sm:$0xff] %vm458, %v446
  %480 = vst.msk [vmem:[%s1 + $0xa8] sm:$0xff] %vm458, %v447
  %481 = vst.msk [vmem:[%s1 + $0xb0] sm:$0xff] %vm458, %v448
  %482 = vst.msk [vmem:[%s1 + $0xb8] sm:$0xff] %vm458, %v449
  %483 = vst.msk [vmem:[%s1 + $0xc0] sm:$0xff] %vm458, %v450
  %484 = vst.msk [vmem:[%s1 + $0xc8] sm:$0xff] %vm458, %v451
  %485 = vst.msk [vmem:[%s1 + $0xd0] sm:$0xff] %vm458, %v452
  %486 = vst.msk [vmem:[%s1 + $0xd8] sm:$0xff] %vm458, %v453
  %487 = vst.msk [vmem:[%s1 + $0xe0] sm:$0xff] %vm458, %v454
  %488 = vst.msk [vmem:[%s1 + $0xe8] sm:$0xff] %vm458, %v455
  %489 = vst.msk [vmem:[%s1 + $0xf0] sm:$0xff] %vm458, %v456
  %490 = vst.msk [vmem:[%s1 + $0xf8] sm:$0xff] %vm458, %v457
  // Predicated region
  $region6: #{tpu_custom_call.1} parent=0 // pred_check
    _
  $region7: #{tpu_custom_call.1} parent=0 // pred_check_branch
    %492 = sbr.rel (0) target = $region9
  $region8: #{tpu_custom_call.1} parent=0 // pred_region
    _
  $region9: #{tpu_custom_call.1} parent=0 // pred_fallthru
    _
  // Predicated region
  $region10: #{tpu_custom_call.1} parent=0 // pred_check
    _
  $region11: #{tpu_custom_call.1} parent=0 // pred_check_branch
    %494 = sbr.rel (0) target = $region13
  $region12: #{tpu_custom_call.1} parent=0 // pred_region
    _
  $region13: #{tpu_custom_call.1} parent=0 // pred_fallthru
    _

</llo_original>
